<compile_context>
chip_gen: v5e
topology: v5e:2x2
jax: 0.10.0
libtpu: 0.0.40
codegen_flags: <defaults>
</compile_context>

<pallas_src>
import functools

import jax
import jax.numpy as jnp
from jax.experimental import pallas as pl
from jax.experimental.pallas import tpu as pltpu

BITS_PRECISION = 8  # synthetic config; any bits >= 2 works

LANES = 128
SUBLANES = 8
TILE_ROWS = 1024                 # 1024 x 128 x 4B = 512 KiB per pipeline buffer
FUSED_MAX_BYTES = 4 << 20        # <= 4 MiB input -> single fused in-VMEM pass


def _round_up(v, m):
    return (v + m - 1) // m * m


# ---------------------------------------------------------------------------
# Fast path: whole tensor resident in VMEM, fused range-track + fake-quant.
# ---------------------------------------------------------------------------
def _fused_quantizer_kernel(x_ref, o_ref, *, qmin, qmax):
    x = x_ref[...].astype(jnp.float32)

    qrange = jnp.float32(min(abs(qmin), abs(qmax)))            # 2^(b-1) - 1
    # Single reduction (one XLU tree) instead of separate min & max.
    float_range = jnp.maximum(jnp.max(jnp.abs(x)), jnp.float32(1e-12))
    scale = qrange / float_range                               # quantize scale
    inv_scale = float_range / qrange                           # dequant multiply

    q = jnp.floor(x * scale + jnp.float32(0.5))                # Round.apply
    q = jnp.clip(q, jnp.float32(qmin), jnp.float32(qmax))
    # zero_point == 0 for the symmetric subclass -> dropped at compile time.
    o_ref[...] = (q * inv_scale).astype(o_ref.dtype)


# ---------------------------------------------------------------------------
# Tiled path, pass 1: global max(|x|) accumulated across the tile grid.
# ---------------------------------------------------------------------------
def _absmax_kernel(x_ref, fr_ref, acc_ref, *, tile_rows, total_rows):
    i = pl.program_id(0)

    @pl.when(i == 0)
    def _init():
        acc_ref[...] = jnp.zeros_like(acc_ref)

    x = x_ref[...].astype(jnp.float32)
    # Mask rows past the real extent (partial last block / wrapper row pad);
    # |0| can never raise the max so zeros are a safe fill.
    row_idx = jax.lax.broadcasted_iota(jnp.int32, x.shape, 0) + i * tile_rows
    ax = jnp.where(row_idx < total_rows, jnp.abs(x), jnp.float32(0.0))
    tile_max = jnp.max(jnp.max(ax, axis=1, keepdims=True), axis=0, keepdims=True)
    acc_ref[...] = jnp.maximum(acc_ref[...], tile_max)

    @pl.when(i == pl.num_programs(0) - 1)
    def _finalize():
        fr_ref[...] = acc_ref[...]


# ---------------------------------------------------------------------------
# Tiled path, pass 2: pure elementwise fake-quant with per-tensor scale.
# ---------------------------------------------------------------------------
def _fakequant_kernel(fr_ref, x_ref, o_ref, *, qmin, qmax):
    qrange = jnp.float32(min(abs(qmin), abs(qmax)))
    float_range = jnp.maximum(fr_ref[...], jnp.float32(1e-12))   # (1, 1)
    scale = qrange / float_range                                 # (1, 1)
    inv_scale = float_range / qrange                             # (1, 1)

    x = x_ref[...].astype(jnp.float32)
    q = jnp.floor(x * scale + jnp.float32(0.5))                  # Round.apply
    q = jnp.clip(q, jnp.float32(qmin), jnp.float32(qmax))
    o_ref[...] = (q * inv_scale).astype(o_ref.dtype)


# ---------------------------------------------------------------------------
# Wrappers
# ---------------------------------------------------------------------------
def _as_lane_major_2d(x):
    """Flatten to a lane-dense (rows, 128) slab; zero-pad only if needed."""
    flat = x.reshape(-1)
    n = flat.shape[0]
    pad = (-n) % LANES
    if pad:
        # TODO(synk): for the rare numel % 128 != 0 case we still pad in the
        # wrapper; a fully in-kernel masked tail would avoid this extra copy.
        flat = jnp.pad(flat, (0, pad))
    rows = flat.shape[0] // LANES
    return flat.reshape(rows, LANES), n


def _fused_forward(x2d, out_dtype, qmin, qmax):
    rows = x2d.shape[0]
    return pl.pallas_call(
        functools.partial(_fused_quantizer_kernel, qmin=qmin, qmax=qmax),
        out_shape=jax.ShapeDtypeStruct((rows, LANES), out_dtype),
        in_specs=[pl.BlockSpec((rows, LANES), lambda: (0, 0),
                               memory_space=pltpu.VMEM)],
        out_specs=pl.BlockSpec((rows, LANES), lambda: (0, 0),
                               memory_space=pltpu.VMEM),
    )(x2d)


def _tiled_forward(x2d, out_dtype, qmin, qmax, tile_rows):
    rows = x2d.shape[0]
    tile_rows = max(SUBLANES, min(_round_up(tile_rows, SUBLANES),
                                  _round_up(rows, SUBLANES)))
    num_tiles = pl.cdiv(rows, tile_rows)

    # Pass 1: max(|x|) -> (1, 1) f32. Reduction across the grid -> "arbitrary".
    float_range = pl.pallas_call(
        functools.partial(_absmax_kernel, tile_rows=tile_rows, total_rows=rows),
        out_shape=jax.ShapeDtypeStruct((1, 1), jnp.float32),
        grid=(num_tiles,),
        in_specs=[pl.BlockSpec((tile_rows, LANES), lambda i: (i, 0))],
        out_specs=pl.BlockSpec((1, 1), lambda i: (0, 0)),
        scratch_shapes=[pltpu.VMEM((1, 1), jnp.float32)],
        compiler_params=pltpu.CompilerParams(
            dimension_semantics=("arbitrary",)),
    )(x2d)

    # Pass 2: elementwise fake-quant; independent tiles -> "parallel"
    # (megacore sharding on v7x).
    return pl.pallas_call(
        functools.partial(_fakequant_kernel, qmin=qmin, qmax=qmax),
        out_shape=jax.ShapeDtypeStruct((rows, LANES), out_dtype),
        grid=(num_tiles,),
        in_specs=[pl.BlockSpec((1, 1), lambda i: (0, 0)),
                  pl.BlockSpec((tile_rows, LANES), lambda i: (i, 0))],
        out_specs=pl.BlockSpec((tile_rows, LANES), lambda i: (i, 0)),
        compiler_params=pltpu.CompilerParams(
            dimension_semantics=("parallel",)),
    )(float_range, x2d)


def quantizer_forward(x, bits_precision=BITS_PRECISION, *,
                      force_tiled=False, tile_rows=TILE_ROWS):
    """Symmetric per-tensor fake quantization of an NCHW (or any) tensor."""
    qmin = -(1 << (bits_precision - 1))
    qmax = (1 << (bits_precision - 1)) - 1

    orig_shape = x.shape
    orig_dtype = x.dtype
    x2d, n = _as_lane_major_2d(x)

    nbytes = x2d.size * x2d.dtype.itemsize
    if force_tiled or nbytes > FUSED_MAX_BYTES:
        out2d = _tiled_forward(x2d, orig_dtype, qmin, qmax, tile_rows)
    else:
        out2d = _fused_forward(x2d, orig_dtype, qmin, qmax)

    out_flat = out2d.reshape(-1)
    if out_flat.shape[0] != n:
        out_flat = out_flat[:n]
    return out_flat.reshape(orig_shape)


# ---------------------------------------------------------------------------
# Pure-JAX reference (mirrors the PyTorch semantics)
# ---------------------------------------------------------------------------
def _reference_forward(x, bits_precision=BITS_PRECISION):
    qmin = -(1 << (bits_precision - 1))
    qmax = (1 << (bits_precision - 1)) - 1
    xf = x.astype(jnp.float32)
    float_range = jnp.maximum(jnp.abs(jnp.min(xf)), jnp.abs(jnp.max(xf)))
    float_range = jnp.maximum(float_range, jnp.float32(1e-12))
    scale = jnp.float32(min(abs(qmin), abs(qmax))) / float_range
    zero_point = jnp.float32(0.0)
    q = jnp.floor(xf * scale - zero_point + 0.5)     # Round.apply
    q = jnp.clip(q, qmin, qmax)
    return ((q + zero_point) / scale).astype(x.dtype)


if __name__ == "__main__":
    key = jax.random.PRNGKey(0)
    k1, k2, k3 = jax.random.split(key, 3)

    # Conv-activation style NCHW inputs.
    x1 = jax.random.normal(k1, (2, 4, 16, 16), dtype=jnp.float32)   # 2048 elems
    x2 = jax.random.normal(k2, (2, 4, 16, 20), dtype=jnp.float32)   # 2560 elems
    x3 = jax.random.normal(k3, (2, 3, 5, 7), dtype=jnp.float32)     # 210 elems

    # 1) fused fast path (single resident block)
    ref1 = _reference_forward(x1)
    out1 = jax.block_until_ready(quantizer_forward(x1))
    assert out1.shape == x1.shape and out1.dtype == x1.dtype
    assert jnp.allclose(out1, ref1, atol=1e-5, rtol=1e-5), "fused path mismatch"

    # 2) tiled two-pass path (forced, small tile -> multi-step grid)
    out1t = jax.block_until_ready(
        quantizer_forward(x1, force_tiled=True, tile_rows=8))
    assert jnp.allclose(out1t, ref1, atol=1e-5, rtol=1e-5), "tiled path mismatch"

    # 3) tiled path with a partial final tile (rows=20, tile=8 -> masked tail)
    ref2 = _reference_forward(x2)
    out2t = jax.block_until_ready(
        quantizer_forward(x2, force_tiled=True, tile_rows=8))
    assert jnp.allclose(out2t, ref2, atol=1e-5, rtol=1e-5), "partial-tile mismatch"

    # 4) fused path with lane-tail padding (210 -> 256 elements)
    ref3 = _reference_forward(x3)
    out3 = jax.block_until_ready(quantizer_forward(x3))
    assert jnp.allclose(out3, ref3, atol=1e-5, rtol=1e-5), "padded path mismatch"

    print("KERNEL_OK")
</pallas_src>

<mosaic_0001>
module attributes {stable_mosaic.version = 11 : i64} {
  func.func @_fused_quantizer_kernel(%arg0: memref<16x128xf32, #tpu.memory_space<vmem>>, %arg1: memref<16x128xf32, #tpu.memory_space<vmem>>) attributes {dimension_semantics = [], scalar_prefetch = 0 : i64, scratch_operands = 0 : i64, tpu.core_type = #tpu.core_type<tc>} {
    %c0 = arith.constant 0 : index
    %c0_0 = arith.constant 0 : index
    %0 = vector.load %arg0[%c0, %c0_0] : memref<16x128xf32, #tpu.memory_space<vmem>>, vector<16x128xf32>
    %1 = math.absf %0 : vector<16x128xf32>
    %2 = vector.shape_cast %1 : vector<16x128xf32> to vector<1x16x128xf32>
    %cst = arith.constant dense<0xFF800000> : vector<1xf32>
    %3 = vector.multi_reduction <maximumf>, %2, %cst [1, 2] : vector<1x16x128xf32> to vector<1xf32>
    %4 = vector.shape_cast %3 : vector<1xf32> to vector<1x1x1xf32>
    %5 = vector.extract %4[0, 0, 0] : f32 from vector<1x1x1xf32>
    %cst_1 = arith.constant 9.99999996E-13 : f32
    %6 = arith.maximumf %5, %cst_1 : f32
    %cst_2 = arith.constant 1.270000e+02 : f32
    %7 = arith.divf %cst_2, %6 : f32
    %cst_3 = arith.constant 1.270000e+02 : f32
    %8 = arith.divf %6, %cst_3 : f32
    %9 = vector.broadcast %7 : f32 to vector<16x128xf32>
    %10 = arith.mulf %0, %9 : vector<16x128xf32>
    %cst_4 = arith.constant 5.000000e-01 : f32
    %11 = vector.broadcast %cst_4 : f32 to vector<16x128xf32>
    %12 = arith.addf %10, %11 : vector<16x128xf32>
    %13 = math.floor %12 : vector<16x128xf32>
    %cst_5 = arith.constant -1.280000e+02 : f32
    %cst_6 = arith.constant 1.270000e+02 : f32
    %14 = vector.broadcast %cst_5 : f32 to vector<16x128xf32>
    %15 = arith.maximumf %14, %13 : vector<16x128xf32>
    %16 = vector.broadcast %cst_6 : f32 to vector<16x128xf32>
    %17 = arith.minimumf %16, %15 : vector<16x128xf32>
    %18 = vector.broadcast %8 : f32 to vector<16x128xf32>
    %19 = arith.mulf %17, %18 : vector<16x128xf32>
    %c0_7 = arith.constant 0 : index
    %c0_8 = arith.constant 0 : index
    %20 = vector.load %arg1[%c0_7, %c0_8] : memref<16x128xf32, #tpu.memory_space<vmem>>, vector<16x128xf32>
    tpu.vector_store %arg1[%c0_7, %c0_8], %19 {strides = array<i32>} : memref<16x128xf32, #tpu.memory_space<vmem>>, vector<16x128xf32>,
    return
  }
}

</mosaic_0001>

<llo_original>
// kernel: tpu_custom_call.1
$region0: #{tpu_custom_call.1}
  #allocation0 [shape = 'u32[]', space=smem, size = 0x4, offset = 0x4, fixed_abs, tag = 'smem constant byte address 0x4 - core index']
  #allocation1 [shape = 'u32[72,128]{1,0:T(1,128)}', space=vmem, size = 0x9000, scoped, tag = 'internal scratch']
  %s0 = inlined_call_operand.hbm [shape: f32[16,128], index: 0, kind: input, shape index: {}]
  %s1 = inlined_call_operand.hbm [shape: f32[16,128], index: 1, kind: output, shape index: {}]
  %s2 = sld [smem:[#allocation0]]
  $region18: #{tpu_custom_call.1} parent=0
    _
  %s4 = ssub.s32 1, %s2
  %s5 = scalar_select 0, %s4, %s2
  $region1: #{tpu_custom_call.1} parent=0
    #allocation2 [shape = 'u8[8192]{0}', space=vmem, size = 0x2000, scoped, tag = 'input window, operand 0, single buffered']
    #allocation3 [shape = 's32[1]{0}', space=sflag, size = 0x4, scoped, tag = 'scoped memory for tpu_custom_call.1']
    #allocation4 [shape = 's32[1]{0}', space=sflag, size = 0x4, scoped, tag = 'scoped memory for tpu_custom_call.1']
    #allocation5 [shape = 'u8[8192]{0}', space=vmem, size = 0x2000, scoped, tag = 'output window, operand 0, single buffered']
    %6 = vsyncpa [#allocation3], 0
    %7 = vsyncpa [#allocation4], 0
    // Predicated region
    $region2: #{tpu_custom_call.1} parent=1 // pred_check
      _
    $region3: #{tpu_custom_call.1} parent=1 // pred_check_branch
      %9 = sbr.rel (0) target = $region5
    $region4: #{tpu_custom_call.1} parent=1 // pred_region
      %11 = vsyncadd [#allocation3], 0
      %s12 = sshll.u32 %s0, 4
      %s13 = int_to_ptr.hbm [resolvable:$true] %s12
      %s14 = sshll.u32 [#allocation2], 4
      %s15 = int_to_ptr.vmem [resolvable:$true] %s14
      %20 = dma.hbm_to_vmem [thread:$0]  %s13, 256, %s15, [#allocation3], 128, 128, 8
    $region5: #{tpu_custom_call.1} parent=1 // pred_fallthru
      _
    // Predicated region
    $region6: #{tpu_custom_call.1} parent=1 // pred_check
      _
    $region7: #{tpu_custom_call.1} parent=1 // pred_check_branch
      %22 = sbr.rel (0) target = $region9
    $region8: #{tpu_custom_call.1} parent=1 // pred_region
      %24 = dma.done [#allocation3], 256
    $region9: #{tpu_custom_call.1} parent=1 // pred_fallthru
      _
    %v25 = vld [vmem:[#allocation2] sm:$0xff]
    %v26 = vld [vmem:[#allocation2 + $0x8] sm:$0xff]
    %v27 = vand.u32 2147483647, %v25
    %v28 = vand.u32 2147483647, %v26
    %v29 = vmax.f32 %v27, %v28
    %30 = vmax.xlane.f32.xlu0 %v29
    %v31 = vpop.xlane.xlu0 %30
    %v32 = vrot.slane %v31, 4
    %v33 = vmax.f32 %v31, %v32
    %v34 = vrot.slane %v33, 2
    %v35 = vmax.f32 %v33, %v34
    %v36 = vrot.slane %v35, 1
    %v37 = vmax.f32 %v35, %v36
    %s38 = vtos %v37
    %s39 = smax.f32 %s38, 1e-12
    %v40 = vstv %s39
    %v41 = vrcp.pop %v40
    %v42 = vmul.f32 %v40, %v41
    %v43 = vsub.f32 1.0, %v42
    %v44 = vmul.f32 %v41, %v43
    %v45 = vadd.f32 %v41, %v44
    %vm46 = vweird.f32 %v40
    %vm47 = vweird.f32 %v41
    %vm48 = vmor %vm46, %vm47
    %v49 = vsel %vm48, %v41, %v45
    %v50 = vand.u32 2147483647, %v40
    %vm51 = vcmp.eq.f32.partialorder %v50, 8.507059e+37
    %v52 = vand.u32 %v40, 2147483648
    %v53 = vor.u32 1.1754944e-38, %v52
    %v54 = vsel %vm51, %v53, %v49
    %s55 = vtos %v54
    %s56 = smul.f32 127.0, %s55
    %v57 = vrcp.pop 127.0
    %v58 = vmul.f32 127.0, %v57
    %v59 = vsub.f32 1.0, %v58
    %v60 = vmul.f32 %v57, %v59
    %v61 = vadd.f32 %v57, %v60
    %vm62 = vweird.f32 %v57
    %v63 = vsel %vm62, %v57, %v61
    %s64 = vtos %v63
    %s65 = smul.f32 %s39, %s64
    %v66 = vstv %s56
    %v67 = vmul.f32 %v25, %v66
    %v68 = vmul.f32 %v26, %v66
    %v69 = vadd.f32 %v67, 0.5
    %v70 = vadd.f32 %v68, 0.5
    %v71 = vfloor.f32 %v69
    %v72 = vfloor.f32 %v70
    %v73 = vmax.f32 %v71, -128.0
    %v74 = vmax.f32 %v72, -128.0
    %v75 = vmin.f32 %v73, 127.0
    %v76 = vmin.f32 %v74, 127.0
    %v77 = vstv %s65
    %v78 = vmul.f32 %v75, %v77
    %v79 = vmul.f32 %v76, %v77
    %80 = vst [vmem:[#allocation5] sm:$0xff] %v78
    %81 = vst [vmem:[#allocation5 + $0x8] sm:$0xff] %v79
    // Predicated region
    $region10: #{tpu_custom_call.1} parent=1 // pred_check
      _
    $region11: #{tpu_custom_call.1} parent=1 // pred_check_branch
      %83 = sbr.rel (0) target = $region13
    $region12: #{tpu_custom_call.1} parent=1 // pred_region
      %85 = vsyncadd [#allocation4], 0
      %s86 = sshll.u32 [#allocation5], 4
      %s87 = int_to_ptr.vmem [resolvable:$true] %s86
      %s88 = sshll.u32 %s1, 4
      %s89 = int_to_ptr.hbm [resolvable:$true] %s88
      %94 = dma.vmem_to_hbm [thread:$0]  %s87, 256, %s89, [#allocation4], 128, 128, 8
    $region13: #{tpu_custom_call.1} parent=1 // pred_fallthru
      _
    // Predicated region
    $region14: #{tpu_custom_call.1} parent=1 // pred_check
      _
    $region15: #{tpu_custom_call.1} parent=1 // pred_check_branch
      %96 = sbr.rel (0) target = $region17
    $region16: #{tpu_custom_call.1} parent=1 // pred_region
      %98 = dma.done [#allocation4], 256
    $region17: #{tpu_custom_call.1} parent=1 // pred_fallthru
      _
    %99 = vsyncpa [#allocation3], 1
    %100 = vsyncpa [#allocation4], 1

</llo_original>
